<compile_context>
chip_gen: v7x
topology: tpu7x:2x2x1
jax: 0.10.0
libtpu: 0.0.40
codegen_flags: <defaults>
</compile_context>

<pallas_src>
import math
import functools

import jax
import jax.numpy as jnp
from jax.experimental import pallas as pl
from jax.experimental.pallas import tpu as pltpu


def _round_up(n, m):
    return ((n + m - 1) // m) * m


def _sublanes(dtype):
    # sublane packing per 32-bit vreg row: f32 -> 8, bf16 -> 16, int8/fp8 -> 32
    return {4: 8, 2: 16, 1: 32}.get(jnp.dtype(dtype).itemsize, 8)


def make_positional_encoding_table(d_model, max_len=5000, dtype=jnp.float32):
    """(max_len, d_model) sinusoid table, built once at init (PyTorch registered buffer).

    Stored 2-D (sublane-dense VMEM tiles) and already cast to the compute dtype so the
    forward pass does no per-call slice/cast HBM pass.
    """
    position = jnp.arange(max_len, dtype=jnp.float32)[:, None]                 # (max_len, 1)
    div_term = jnp.exp(jnp.arange(0, d_model, 2, dtype=jnp.float32)
                       * (-math.log(10000.0) / d_model))                       # (d_model/2,)
    pe = jnp.zeros((max_len, d_model), dtype=jnp.float32)
    pe = pe.at[:, 0::2].set(jnp.sin(position * div_term))
    pe = pe.at[:, 1::2].set(jnp.cos(position * div_term))
    return pe.astype(dtype)


def _hash_bits_u32(idx_u32, seed_u32):
    """splitmix32 / lowbias32-style integer hash -> uniform uint32 bits. Pure VPU int ops."""
    x = idx_u32 ^ seed_u32
    x = (x ^ (x >> jnp.uint32(16))) * jnp.uint32(0x7FEB352D)
    x = (x ^ (x >> jnp.uint32(15))) * jnp.uint32(0x846CA68B)
    x = x ^ (x >> jnp.uint32(16))
    return x


def _pe_kernel(seed_ref, x_ref, pe_ref, o_ref, *, dropout_p, training):
    # x_ref/o_ref: (tS, B, D) in VMEM; pe_ref: (tS, D) in VMEM; seed_ref: (1,) int32 in SMEM.
    y = x_ref[...] + pe_ref[...][:, None, :]            # broadcast pe over batch, in x.dtype
    if training and dropout_p > 0.0:
        # Inverted dropout with a stateless counter-based mask (global element index + seed).
        # TODO(synk): does not bit-match torch.nn.Dropout's RNG stream; semantics match.
        tS, B, D = x_ref.shape
        s = jax.lax.broadcasted_iota(jnp.int32, (tS, B, D), 0) + pl.program_id(0) * tS
        b = jax.lax.broadcasted_iota(jnp.int32, (tS, B, D), 1)
        d = jax.lax.broadcasted_iota(jnp.int32, (tS, B, D), 2)
        flat = ((s * B + b) * D + d).astype(jnp.uint32)
        bits = _hash_bits_u32(flat, seed_ref[0].astype(jnp.uint32))
        # Compare the top 31 bits as int32 (avoids relying on unsigned vector compares).
        bits31 = (bits >> jnp.uint32(1)).astype(jnp.int32)
        threshold = jnp.int32(min(int(dropout_p * float(2 ** 31)), 2 ** 31 - 1))
        keep = bits31 >= threshold                                   # P(keep) = 1 - p
        scale = jnp.asarray(1.0 / (1.0 - dropout_p), dtype=y.dtype)  # static constant
        y = jnp.where(keep, y * scale, jnp.zeros_like(y))
    o_ref[...] = y.astype(o_ref.dtype)


def _generation_budget():
    """(target_tile_bytes, vmem_limit_bytes), generation-aware when a TPU is visible."""
    try:
        vmem = getattr(pltpu.get_tpu_info(), "vmem_capacity_bytes", 64 * 1024 * 1024)
    except Exception:
        vmem = 64 * 1024 * 1024            # unknown backend / interpret mode: assume small VMEM
    if vmem >= 128 * 1024 * 1024:          # v5e / v6e: 128 MiB VMEM -> bigger tiles, higher limit
        return 8 * 1024 * 1024, 64 * 1024 * 1024
    return 4 * 1024 * 1024, 32 * 1024 * 1024   # v7x (64 MiB VMEM) or unknown


def _choose_seq_tile(S, B, D, dtype, target_tile_bytes):
    """Pick an S-tile so the PADDED x tile is ~target bytes (B -> sublanes, D -> 128 lanes)."""
    itemsize = jnp.dtype(dtype).itemsize
    sub = _sublanes(dtype)
    padded_row_bytes = _round_up(B, sub) * _round_up(D, 128) * itemsize
    return int(max(1, target_tile_bytes // padded_row_bytes))


def positional_encoding_forward(x, pe_table, *, dropout_p=0.1, training=False, seed=0,
                                seq_tile=None):
    """Pallas forward: x (S, B, D) -> dropout(x + pe[:S])."""
    S, B, D = x.shape
    assert pe_table.ndim == 2 and pe_table.shape[1] == D and pe_table.shape[0] >= S
    pe_table = pe_table.astype(x.dtype)          # no-op when the table was built in x.dtype
    itemsize = jnp.dtype(x.dtype).itemsize
    sub = _sublanes(x.dtype)
    target_tile_bytes, vmem_limit_bytes = _generation_budget()

    if seq_tile is None:
        seq_tile = _choose_seq_tile(S, B, D, x.dtype, target_tile_bytes)
        # Keep >= ~4 grid steps (when S allows) so v7x can shard S across its 2 TensorCores.
        seq_tile = min(seq_tile, max(sub, _round_up(pl.cdiv(S, 4), sub)))
    # pe's block is 2-D (seq_tile, D): second-minor dim must be a multiple of the sublane count.
    seq_tile = max(sub, (int(seq_tile) // sub) * sub)

    if S < sub:
        # Tiny-sequence fallback: one block matching the (sliced) arrays exactly.
        seq_tile = S
        pe_in = pe_table[:S]
    else:
        seq_tile = min(seq_tile, (S // sub) * sub)
        pe_in = pe_table                       # index straight into the full table (no slice pass)
    grid = (pl.cdiv(S, seq_tile),)

    kernel = functools.partial(_pe_kernel, dropout_p=float(dropout_p), training=bool(training))
    seed_arr = jnp.asarray([seed], dtype=jnp.int32)

    x_bytes = S * B * D * itemsize
    pe_bytes = min(pe_in.shape[0], grid[0] * seq_tile) * D * itemsize
    cost = pl.CostEstimate(flops=S * B * D, transcendentals=0,
                           bytes_accessed=2 * x_bytes + pe_bytes)   # read x + pe, write out

    return pl.pallas_call(
        kernel,
        out_shape=jax.ShapeDtypeStruct((S, B, D), x.dtype),
        grid=grid,
        in_specs=[
            pl.BlockSpec(memory_space=pltpu.MemorySpace.SMEM),       # seed scalar (whole array)
            pl.BlockSpec((seq_tile, B, D), lambda i: (i, 0, 0)),     # x tile
            pl.BlockSpec((seq_tile, D), lambda i: (i, 0)),           # pe tile (sublane-dense 2-D)
        ],
        out_specs=pl.BlockSpec((seq_tile, B, D), lambda i: (i, 0, 0)),
        compiler_params=pltpu.CompilerParams(
            dimension_semantics=("parallel",),       # shard S-tiles across TCs on v7x
            vmem_limit_bytes=vmem_limit_bytes,       # generation-aware explicit limit
        ),
        cost_estimate=cost,
    )(seed_arr, x, pe_in)


if __name__ == "__main__":
    MAX_LEN = 5000

    # 1) Small shapes consistent with the module forward: x is (seq_len, batch, d_model).
    S, B, D = 8, 2, 32
    x = jax.random.normal(jax.random.PRNGKey(0), (S, B, D), dtype=jnp.float32)
    pe_table = make_positional_encoding_table(D, MAX_LEN, dtype=jnp.float32)

    out = jax.block_until_ready(
        positional_encoding_forward(x, pe_table, dropout_p=0.1, training=False, seed=0))
    ref = x + pe_table[:S][:, None, :]
    assert out.shape == (S, B, D)
    assert jnp.allclose(out, ref, atol=1e-6, rtol=1e-6), "mismatch vs reference (eval path)"

    # 2) Multi-tile grid correctness: force a 4-step grid with seq_tile=64.
    S2, B2, D2 = 256, 2, 128
    x2 = jax.random.normal(jax.random.PRNGKey(1), (S2, B2, D2), dtype=jnp.float32)
    pe2 = make_positional_encoding_table(D2, MAX_LEN, dtype=jnp.float32)
    out2 = jax.block_until_ready(
        positional_encoding_forward(x2, pe2, dropout_p=0.1, training=False, seq_tile=64))
    ref2 = x2 + pe2[:S2][:, None, :]
    assert jnp.allclose(out2, ref2, atol=1e-6, rtol=1e-6), "mismatch vs reference (tiled path)"

    # 3) Training-mode dropout: kept values == (x + pe)/(1-p), dropped == 0, keep rate ~= 1-p.
    p = 0.1
    out3 = jax.block_until_ready(
        positional_encoding_forward(x2, pe2, dropout_p=p, training=True, seed=123, seq_tile=64))
    kept = out3 != 0.0
    keep_rate = float(jnp.mean(kept.astype(jnp.float32)))
    assert 0.8 < keep_rate < 0.98, f"unexpected dropout keep rate {keep_rate}"
    scaled_ref = ref2 / (1.0 - p)
    assert jnp.allclose(jnp.where(kept, out3, scaled_ref), scaled_ref, atol=1e-5, rtol=1e-5), \
        "kept dropout values do not match scaled reference"

    print("KERNEL_OK")
</pallas_src>

<mosaic_0001>
module attributes {stable_mosaic.version = 11 : i64} {
  func.func @_pe_kernel(%arg0: i32, %arg1: memref<1xi32, #tpu.memory_space<smem>>, %arg2: memref<8x2x32xf32, #tpu.memory_space<vmem>>, %arg3: memref<8x32xf32, #tpu.memory_space<vmem>>, %arg4: memref<8x2x32xf32, #tpu.memory_space<vmem>>) attributes {dimension_semantics = [#tpu.dimension_semantics<parallel>], iteration_bounds = array<i64: 1>, scalar_prefetch = 0 : i64, scratch_operands = 0 : i64, tpu.core_type = #tpu.core_type<tc>, window_params = [{transform_indices = @transform_0, window_bounds = array<i64: 1>}, {transform_indices = @transform_1, window_bounds = array<i64: 8, 2, 32>}, {transform_indices = @transform_2, window_bounds = array<i64: 8, 32>}, {transform_indices = @transform_3, window_bounds = array<i64: 8, 2, 32>}]} {
    %c0 = arith.constant 0 : index
    %c0_0 = arith.constant 0 : index
    %c0_1 = arith.constant 0 : index
    %0 = vector.load %arg2[%c0, %c0_0, %c0_1] : memref<8x2x32xf32, #tpu.memory_space<vmem>>, vector<8x2x32xf32>
    %c0_2 = arith.constant 0 : index
    %c0_3 = arith.constant 0 : index
    %1 = vector.load %arg3[%c0_2, %c0_3] : memref<8x32xf32, #tpu.memory_space<vmem>>, vector<8x32xf32>
    %2 = vector.shape_cast %1 : vector<8x32xf32> to vector<8x1x32xf32>
    %3 = vector.broadcast %2 : vector<8x1x32xf32> to vector<8x2x32xf32>
    %4 = arith.addf %0, %3 : vector<8x2x32xf32>
    %c0_4 = arith.constant 0 : index
    %c0_5 = arith.constant 0 : index
    %c0_6 = arith.constant 0 : index
    %5 = vector.load %arg4[%c0_4, %c0_5, %c0_6] : memref<8x2x32xf32, #tpu.memory_space<vmem>>, vector<8x2x32xf32>
    tpu.vector_store %arg4[%c0_4, %c0_5, %c0_6], %4 {strides = array<i32>} : memref<8x2x32xf32, #tpu.memory_space<vmem>>, vector<8x2x32xf32>,
    return
  }
  func.func @transform_0(%arg0: i32) -> i32 {
    %c0_i32 = arith.constant 0 : i32
    %c0_i32_0 = arith.constant 0 : i32
    return %c0_i32 : i32
  }
  func.func @transform_1(%arg0: i32) -> (i32, i32, i32) {
    %c0_i32 = arith.constant 0 : i32
    %c0_i32_0 = arith.constant 0 : i32
    %c0_i32_1 = arith.constant 0 : i32
    return %arg0, %c0_i32, %c0_i32_0 : i32, i32, i32
  }
  func.func @transform_2(%arg0: i32) -> (i32, i32) {
    %c0_i32 = arith.constant 0 : i32
    %c0_i32_0 = arith.constant 0 : i32
    return %arg0, %c0_i32 : i32, i32
  }
  func.func @transform_3(%arg0: i32) -> (i32, i32, i32) {
    %c0_i32 = arith.constant 0 : i32
    %c0_i32_0 = arith.constant 0 : i32
    %c0_i32_1 = arith.constant 0 : i32
    return %arg0, %c0_i32, %c0_i32_0 : i32, i32, i32
  }
}

</mosaic_0001>

<llo_original>
// kernel: tpu_custom_call.1
$region0: #{tpu_custom_call.1}
  #allocation0 [shape = 'u32[]', space=smem, size = 0x4, offset = 0x4, fixed_abs, tag = 'smem constant byte address 0x4 - core index']
  #allocation1 [shape = 'u32[144,128]{1,0:T(1,128)}', space=vmem, size = 0x12000, scoped, tag = 'internal scratch']
  #allocation2 [shape = 's32[1]{0:T(128)S(6)}', space=smem, size = 0x200, scoped, tag = 'scoped memory for tpu_custom_call.1']
  %s0 = inlined_call_operand.<no memory space> [shape: s32[1], index: 0, kind: input, shape index: {}]
  %s1 = inlined_call_operand.vmem [shape: f32[8,2,32], index: 1, kind: input, shape index: {}]
  %s2 = inlined_call_operand.vmem [shape: f32[5000,32], index: 2, kind: input, shape index: {}]
  %s3 = inlined_call_operand.hbm [shape: f32[8,2,32], index: 3, kind: output, shape index: {}]
  %s4 = sld [smem:[#allocation0]]
  $region22: #{tpu_custom_call.1} parent=0
    _
  %s6 = ssub.s32 1, %s4
  %s7 = scalar_select 0, %s6, %s4
  %8 = sst [smem:[#allocation2]] %s0
  $region1: #{tpu_custom_call.1} parent=0
    #allocation3 [shape = 'u8[8192]{0}', space=vmem, size = 0x2000, scoped, tag = 'output window, operand 0, single buffered']
    #allocation4 [shape = 's32[1]{0}', space=sflag, size = 0x4, scoped, tag = 'scoped memory for tpu_custom_call.1']
    %9 = vsyncpa [#allocation4], 0
    // Predicated region
    $region2: #{tpu_custom_call.1} parent=1 // pred_check
      _
    $region3: #{tpu_custom_call.1} parent=1 // pred_check_branch
      %11 = sbr.rel (0) target = $region5
    $region4: #{tpu_custom_call.1} parent=1 // pred_region
      _
    $region5: #{tpu_custom_call.1} parent=1 // pred_fallthru
      _
    // Predicated region
    $region6: #{tpu_custom_call.1} parent=1 // pred_check
      _
    $region7: #{tpu_custom_call.1} parent=1 // pred_check_branch
      %13 = sbr.rel (0) target = $region9
    $region8: #{tpu_custom_call.1} parent=1 // pred_region
      _
    $region9: #{tpu_custom_call.1} parent=1 // pred_fallthru
      _
    // Predicated region
    $region10: #{tpu_custom_call.1} parent=1 // pred_check
      _
    $region11: #{tpu_custom_call.1} parent=1 // pred_check_branch
      %15 = sbr.rel (0) target = $region13
    $region12: #{tpu_custom_call.1} parent=1 // pred_region
      _
    $region13: #{tpu_custom_call.1} parent=1 // pred_fallthru
      _
    %v16 = vld [vmem:[%s1] sm:$0x3]
    %v17 = vld [vmem:[%s1 + $0x2] sm:$0x3]
    %v18 = vld [vmem:[%s1 + $0x4] sm:$0x3]
    %v19 = vld [vmem:[%s1 + $0x6] sm:$0x3]
    %v20 = vld [vmem:[%s1 + $0x8] sm:$0x3]
    %v21 = vld [vmem:[%s1 + $0xa] sm:$0x3]
    %v22 = vld [vmem:[%s1 + $0xc] sm:$0x3]
    %v23 = vld [vmem:[%s1 + $0xe] sm:$0x3]
    %v24 = vld [vmem:[%s2] sm:$0xff]
    %v26 = vcombine.high %v24, %v24
    %v28 = vunpack.c.l.s4 1966171168
    %v29 = vunpack.c.0.s8 %v28
    %v30 = vlaneseq
    %v31 = vshrl.u32 %v30, 7
    %v32 = vsub.s32 %v29, %v31
    %v33 = vrot.slane %v24, %v32
    %v35 = vunpack.c.l.s4 1966171168
    %v36 = vunpack.c.0.s8 %v35
    %v37 = vlaneseq
    %v38 = vshrl.u32 %v37, 7
    %v39 = vsub.s32 %v36, %v38
    %v40 = vrot.slane %v26, %v39
    %v41 = vcombine.high %v33, %v33
    %v42 = vcombine.high %v40, %v40
    %v44 = vunpack.c.l.s4 1966171168
    %v45 = vunpack.c.0.s8 %v44
    %v46 = vlaneseq
    %v47 = vshrl.u32 %v46, 7
    %v48 = vsub.s32 %v45, %v47
    %v49 = vrot.slane %v33, %v48
    %v51 = vunpack.c.l.s4 1966171168
    %v52 = vunpack.c.0.s8 %v51
    %v53 = vlaneseq
    %v54 = vshrl.u32 %v53, 7
    %v55 = vsub.s32 %v52, %v54
    %v56 = vrot.slane %v40, %v55
    %v58 = vunpack.c.l.s4 1966171168
    %v59 = vunpack.c.0.s8 %v58
    %v60 = vlaneseq
    %v61 = vshrl.u32 %v60, 7
    %v62 = vsub.s32 %v59, %v61
    %v63 = vrot.slane %v41, %v62
    %v65 = vunpack.c.l.s4 1966171168
    %v66 = vunpack.c.0.s8 %v65
    %v67 = vlaneseq
    %v68 = vshrl.u32 %v67, 7
    %v69 = vsub.s32 %v66, %v68
    %v70 = vrot.slane %v42, %v69
    %v71 = vcombine.high %v49, %v49
    %v72 = vcombine.high %v56, %v56
    %v73 = vcombine.high %v63, %v63
    %v74 = vcombine.high %v70, %v70
    %v75 = vlaneseq
    %v76 = vshrl.u32 %v75, 7
    %v77 = vsub.s32 0, %v76
    %v78 = vrot.slane %v49, %v77
    %v79 = vlaneseq
    %v80 = vshrl.u32 %v79, 7
    %v81 = vsub.s32 0, %v80
    %v82 = vrot.slane %v63, %v81
    %v83 = vlaneseq
    %v84 = vshrl.u32 %v83, 7
    %v85 = vsub.s32 0, %v84
    %v86 = vrot.slane %v71, %v85
    %v87 = vlaneseq
    %v88 = vshrl.u32 %v87, 7
    %v89 = vsub.s32 0, %v88
    %v90 = vrot.slane %v73, %v89
    %v91 = vlaneseq
    %v92 = vshrl.u32 %v91, 7
    %v93 = vsub.s32 0, %v92
    %v94 = vrot.slane %v56, %v93
    %v95 = vlaneseq
    %v96 = vshrl.u32 %v95, 7
    %v97 = vsub.s32 0, %v96
    %v98 = vrot.slane %v70, %v97
    %v99 = vlaneseq
    %v100 = vshrl.u32 %v99, 7
    %v101 = vsub.s32 0, %v100
    %v102 = vrot.slane %v72, %v101
    %v103 = vlaneseq
    %v104 = vshrl.u32 %v103, 7
    %v105 = vsub.s32 0, %v104
    %v106 = vrot.slane %v74, %v105
    %v115 = vadd.f32 %v16, %v78
    %v116 = vadd.f32 %v17, %v82
    %v117 = vadd.f32 %v18, %v86
    %v118 = vadd.f32 %v19, %v90
    %v119 = vadd.f32 %v20, %v94
    %v120 = vadd.f32 %v21, %v98
    %v121 = vadd.f32 %v22, %v102
    %v122 = vadd.f32 %v23, %v106
    %vm123 = vcmask 254976
    %124 = vst.msk [vmem:[#allocation3] sm:$0x3] %vm123, %v115
    %125 = vst.msk [vmem:[#allocation3 + $0x2] sm:$0x3] %vm123, %v116
    %126 = vst.msk [vmem:[#allocation3 + $0x4] sm:$0x3] %vm123, %v117
    %127 = vst.msk [vmem:[#allocation3 + $0x6] sm:$0x3] %vm123, %v118
    %128 = vst.msk [vmem:[#allocation3 + $0x8] sm:$0x3] %vm123, %v119
    %129 = vst.msk [vmem:[#allocation3 + $0xa] sm:$0x3] %vm123, %v120
    %130 = vst.msk [vmem:[#allocation3 + $0xc] sm:$0x3] %vm123, %v121
    %131 = vst.msk [vmem:[#allocation3 + $0xe] sm:$0x3] %vm123, %v122
    // Predicated region
    $region14: #{tpu_custom_call.1} parent=1 // pred_check
      _
    $region15: #{tpu_custom_call.1} parent=1 // pred_check_branch
      %133 = sbr.rel (0) target = $region17
    $region16: #{tpu_custom_call.1} parent=1 // pred_region
      %s135 = ssub.s32 256, 256
      %136 = vsyncadd [#allocation4], %s135
      %s137 = sshll.u32 [#allocation3], 4
      %s138 = int_to_ptr.vmem [resolvable:$true] %s137
      %143 = dma.vmem_to_hbm [thread:$0]  %s138, 256, %s3, [#allocation4], 32, 32, 2
    $region17: #{tpu_custom_call.1} parent=1 // pred_fallthru
      _
    // Predicated region
    $region18: #{tpu_custom_call.1} parent=1 // pred_check
      _
    $region19: #{tpu_custom_call.1} parent=1 // pred_check_branch
      %145 = sbr.rel (0) target = $region21
    $region20: #{tpu_custom_call.1} parent=1 // pred_region
      %146 = dma.done [#allocation4], 256
    $region21: #{tpu_custom_call.1} parent=1 // pred_fallthru
      _
    %147 = vsyncpa [#allocation4], 1

</llo_original>
